<compile_context>
chip_gen: v5e
topology: v5e:2x2
jax: 0.10.0
libtpu: 0.0.40
codegen_flags: <defaults>
</compile_context>

<pallas_src>
import functools
import math

import jax
import jax.numpy as jnp
from jax import lax
from jax.experimental import pallas as pl
from jax.experimental.pallas import tpu as pltpu

# Large finite negative used for causal masking (avoids inf/NaN arithmetic in
# the online-softmax rescaling).
_NEG_BIG = -0.7 * float(jnp.finfo(jnp.float32).max)


def _mqa_flash_kernel(xq_ref, xk_ref, wq_ref, wk_ref, wv_ref, wo_ref,
                      o_ref,
                      q_scr, m_scr, l_scr, acc_scr,
                      *, heads, dim_head, eps, tq, tk, compute_dtype):
    qi = pl.program_id(1)
    ki = pl.program_id(2)
    num_kv = pl.num_programs(2)

    q_start = qi * tq
    k_start = ki * tk
    scale = dim_head ** -0.5

    def rmsnorm(x2d):
        d = x2d.shape[-1]
        norm = jnp.sqrt(jnp.sum(x2d * x2d, axis=-1, keepdims=True)) * (d ** -0.5)
        return x2d / jnp.maximum(norm, eps)

    # ---- once per q tile: RMSNorm + Q projection, init online-softmax state ----
    @pl.when(ki == 0)
    def _init():
        xq = xq_ref[0].astype(jnp.float32)                       # (tq, dim)
        normed_q = rmsnorm(xq).astype(compute_dtype)
        q = jnp.dot(normed_q, wq_ref[...],
                    preferred_element_type=jnp.float32) * scale   # (tq, heads*dh)
        # Head-batched layout: stack all heads along rows (MXU M dimension),
        # row r <-> (head = r // tq, query = r % tq).
        q_r = jnp.concatenate(
            [q[:, h * dim_head:(h + 1) * dim_head] for h in range(heads)], axis=0)
        q_scr[...] = q_r.astype(compute_dtype)                    # (heads*tq, dh)
        m_scr[...] = jnp.full(m_scr.shape, -jnp.inf, jnp.float32)
        l_scr[...] = jnp.zeros(l_scr.shape, jnp.float32)
        acc_scr[...] = jnp.zeros(acc_scr.shape, jnp.float32)

    # ---- per kv tile: shared K/V projection + one online-softmax step ----
    # Skip kv tiles that lie entirely in the causal-masked future.
    @pl.when(k_start <= q_start + tq - 1)
    def _step():
        xk = xk_ref[0].astype(jnp.float32)                        # (tk, dim)
        normed_k = rmsnorm(xk).astype(compute_dtype)
        k = jnp.dot(normed_k, wk_ref[...],
                    preferred_element_type=jnp.float32)            # (tk, dh)
        v = jnp.dot(normed_k, wv_ref[...],
                    preferred_element_type=jnp.float32)            # (tk, dh)

        # Scores for every head in one MXU matmul: (heads*tq, dh) @ (dh, tk).
        s = jnp.dot(q_scr[...], k.astype(compute_dtype).T,
                    preferred_element_type=jnp.float32)            # (heads*tq, tk)

        rows = lax.broadcasted_iota(jnp.int32, (heads * tq, tk), 0)
        cols = lax.broadcasted_iota(jnp.int32, (heads * tq, tk), 1)
        q_pos = q_start + rows % tq          # rows are head-major: r = h*tq + t
        k_pos = k_start + cols
        masked = k_pos > q_pos

        s = jnp.where(masked, _NEG_BIG, s)                         # f32 softmax math
        m_prev = m_scr[...]
        m_new = jnp.maximum(m_prev, jnp.max(s, axis=-1, keepdims=True))
        p = jnp.where(masked, 0.0, jnp.exp(s - m_new))
        alpha = jnp.exp(m_prev - m_new)
        l_scr[...] = alpha * l_scr[...] + jnp.sum(p, axis=-1, keepdims=True)
        acc_scr[...] = alpha * acc_scr[...] + jnp.dot(
            p.astype(compute_dtype), v.astype(compute_dtype),
            preferred_element_type=jnp.float32)
        m_scr[...] = m_new

    # ---- once per q tile: normalize, concat heads, output projection ----
    @pl.when(ki == num_kv - 1)
    def _finalize():
        o_n = acc_scr[...] * pl.reciprocal(l_scr[...], approx=True)  # (heads*tq, dh)
        out_cat = jnp.concatenate(
            [o_n[h * tq:(h + 1) * tq, :] for h in range(heads)], axis=-1)  # (tq, inner)
        y = jnp.dot(out_cat.astype(compute_dtype), wo_ref[...],
                    preferred_element_type=jnp.float32)
        o_ref[0] = y.astype(o_ref.dtype)


def attention_forward(x, g, wq, wkv, wo, *, heads, dim_head, eps=1e-8,
                      block_q=128, block_k=128, compute_dtype=jnp.bfloat16):
    """Forward pass of the MEGABYTE Attention module.

    x: (b, n, dim); g: (dim,) RMSNorm gain; wq: (dim, heads*dim_head);
    wkv: (dim, 2*dim_head); wo: (heads*dim_head, dim). Weights stored transposed
    (in_features, out_features) so the kernel computes x @ W (== nn.Linear).
    """
    b, n, dim = x.shape
    inner = heads * dim_head
    assert wq.shape == (dim, inner)
    assert wkv.shape == (dim, 2 * dim_head)
    assert wo.shape == (inner, dim)

    tq = min(block_q, n)
    tk = min(block_k, n)
    assert n % tq == 0 and n % tk == 0, "seq len must divide the q/k tile sizes"
    # TODO(synk): pad n to a tile multiple for arbitrary sequence lengths.

    # Fold the RMSNorm gain into the projection weights once (weights, not
    # activations), split to_kv into Wk / Wv, and cast to the MXU operand dtype.
    wq_eff = (g[:, None] * wq).astype(compute_dtype)
    wk_eff = (g[:, None] * wkv[:, :dim_head]).astype(compute_dtype)
    wv_eff = (g[:, None] * wkv[:, dim_head:]).astype(compute_dtype)
    wo_eff = wo.astype(compute_dtype)

    kernel = functools.partial(
        _mqa_flash_kernel, heads=heads, dim_head=dim_head, eps=eps,
        tq=tq, tk=tk, compute_dtype=compute_dtype)

    nq_tiles = n // tq
    nk_tiles = n // tk
    grid = (b, nq_tiles, nk_tiles)

    flops = int(2 * b * n * dim * inner                       # Q projection
                + 2 * b * nq_tiles * n * dim * 2 * dim_head   # K/V proj (recomputed per q tile)
                + 4 * b * heads * n * n * dim_head            # QK^T and PV
                + 2 * b * n * inner * dim)                    # output projection
    transcendentals = int(b * heads * n * n)
    bytes_accessed = int(x.nbytes * (2 + nq_tiles)
                         + (wq_eff.nbytes + wk_eff.nbytes + wv_eff.nbytes
                            + wo_eff.nbytes) * b * nq_tiles * nk_tiles)

    return pl.pallas_call(
        kernel,
        out_shape=jax.ShapeDtypeStruct((b, n, dim), x.dtype),
        grid=grid,
        in_specs=[
            pl.BlockSpec((1, tq, dim), lambda bi, qi, ki: (bi, qi, 0)),  # x (q tile)
            pl.BlockSpec((1, tk, dim), lambda bi, qi, ki: (bi, ki, 0)),  # x (kv tile)
            pl.BlockSpec((dim, inner), lambda bi, qi, ki: (0, 0)),       # Wq (gain folded)
            pl.BlockSpec((dim, dim_head), lambda bi, qi, ki: (0, 0)),    # Wk (gain folded)
            pl.BlockSpec((dim, dim_head), lambda bi, qi, ki: (0, 0)),    # Wv (gain folded)
            pl.BlockSpec((inner, dim), lambda bi, qi, ki: (0, 0)),       # Wo
        ],
        out_specs=pl.BlockSpec((1, tq, dim), lambda bi, qi, ki: (bi, qi, 0)),
        scratch_shapes=[
            pltpu.VMEM((heads * tq, dim_head), compute_dtype),  # pre-scaled Q (head-batched)
            pltpu.VMEM((heads * tq, 1), jnp.float32),           # running max m
            pltpu.VMEM((heads * tq, 1), jnp.float32),           # running denom l
            pltpu.VMEM((heads * tq, dim_head), jnp.float32),    # output accumulator
        ],
        compiler_params=pltpu.CompilerParams(
            dimension_semantics=("parallel", "parallel", "arbitrary")),
        cost_estimate=pl.CostEstimate(flops=flops,
                                      transcendentals=transcendentals,
                                      bytes_accessed=bytes_accessed),
    )(x, x, wq_eff, wk_eff, wv_eff, wo_eff)


def attention_reference(x, g, wq, wkv, wo, *, heads, dim_head, eps=1e-8):
    """Pure-JAX reference mirroring the PyTorch module exactly."""
    b, n, dim = x.shape
    norm = jnp.linalg.norm(x, axis=-1, keepdims=True) * (dim ** -0.5)
    normed = x / jnp.maximum(norm, eps) * g
    q = normed @ wq                                  # (b, n, h*d)
    kv = normed @ wkv                                # (b, n, 2*d)
    k, v = kv[..., :dim_head], kv[..., dim_head:]
    q = q.reshape(b, n, heads, dim_head).transpose(0, 2, 1, 3)   # (b, h, n, d)
    sim = jnp.einsum('bhid,bjd->bhij', q, k) * (dim_head ** -0.5)
    mask = jnp.triu(jnp.ones((n, n), dtype=bool), 1)
    sim = jnp.where(mask, -jnp.finfo(jnp.float32).max, sim)
    attn = jax.nn.softmax(sim, axis=-1)
    out = jnp.einsum('bhij,bjd->bhid', attn, v)
    out = out.transpose(0, 2, 1, 3).reshape(b, n, heads * dim_head)
    return out @ wo


if __name__ == "__main__":
    heads, dim_head = 4, 16
    dim = 32
    inner = heads * dim_head

    key = jax.random.PRNGKey(0)
    kx, kg, kq, kkv, ko, kx2 = jax.random.split(key, 6)

    g = 1.0 + 0.1 * jax.random.normal(kg, (dim,), dtype=jnp.float32)
    wq = jax.random.normal(kq, (dim, inner), jnp.float32) * (1.0 / math.sqrt(dim))
    wkv = jax.random.normal(kkv, (dim, 2 * dim_head), jnp.float32) * (1.0 / math.sqrt(dim))
    wo = jax.random.normal(ko, (inner, dim), jnp.float32) * (1.0 / math.sqrt(inner))

    # --- small shape (single tile) ---
    batch, seq = 2, 8
    x = jax.random.normal(kx, (batch, seq, dim), jnp.float32)
    ref = attention_reference(x, g, wq, wkv, wo, heads=heads, dim_head=dim_head)

    out_f32 = attention_forward(x, g, wq, wkv, wo, heads=heads, dim_head=dim_head,
                                compute_dtype=jnp.float32)
    out_f32 = jax.block_until_ready(out_f32)
    assert out_f32.shape == (batch, seq, dim)
    assert jnp.allclose(out_f32, ref, atol=3e-2, rtol=3e-2), "f32 mismatch vs reference"

    out_bf16 = attention_forward(x, g, wq, wkv, wo, heads=heads, dim_head=dim_head,
                                 compute_dtype=jnp.bfloat16)
    out_bf16 = jax.block_until_ready(out_bf16)
    assert jnp.allclose(out_bf16, ref, atol=2e-1, rtol=2e-1), "bf16 mismatch vs reference"

    # --- larger shape exercising flash q/kv tiling + causal tile skip ---
    batch2, seq2 = 2, 256
    x2 = jax.random.normal(kx2, (batch2, seq2, dim), jnp.float32)
    ref2 = attention_reference(x2, g, wq, wkv, wo, heads=heads, dim_head=dim_head)
    out2 = attention_forward(x2, g, wq, wkv, wo, heads=heads, dim_head=dim_head,
                             block_q=128, block_k=128, compute_dtype=jnp.float32)
    out2 = jax.block_until_ready(out2)
    assert jnp.allclose(out2, ref2, atol=3e-2, rtol=3e-2), "tiled mismatch vs reference"

    print("KERNEL_OK")
</pallas_src>

<mosaic_0001>
module attributes {stable_mosaic.version = 11 : i64} {
  func.func @_mqa_flash_kernel(%arg0: i32, %arg1: i32, %arg2: i32, %arg3: memref<1x8x32xf32, #tpu.memory_space<vmem>>, %arg4: memref<1x8x32xf32, #tpu.memory_space<vmem>>, %arg5: memref<32x64xf32, #tpu.memory_space<vmem>>, %arg6: memref<32x16xf32, #tpu.memory_space<vmem>>, %arg7: memref<32x16xf32, #tpu.memory_space<vmem>>, %arg8: memref<64x32xf32, #tpu.memory_space<vmem>>, %arg9: memref<1x8x32xf32, #tpu.memory_space<vmem>>, %arg10: memref<32x16xf32, #tpu.memory_space<vmem>>, %arg11: memref<32x1xf32, #tpu.memory_space<vmem>>, %arg12: memref<32x1xf32, #tpu.memory_space<vmem>>, %arg13: memref<32x16xf32, #tpu.memory_space<vmem>>) attributes {dimension_semantics = [#tpu.dimension_semantics<parallel>, #tpu.dimension_semantics<parallel>, #tpu.dimension_semantics<arbitrary>], iteration_bounds = array<i64: 2, 1, 1>, scalar_prefetch = 0 : i64, scratch_operands = 4 : i64, tpu.core_type = #tpu.core_type<tc>, window_params = [{transform_indices = @transform_0, window_bounds = array<i64: 1, 8, 32>}, {transform_indices = @transform_1, window_bounds = array<i64: 1, 8, 32>}, {pipeline_mode = #tpu.pipeline_mode<synchronous>, transform_indices = @transform_2, window_bounds = array<i64: 32, 64>}, {pipeline_mode = #tpu.pipeline_mode<synchronous>, transform_indices = @transform_3, window_bounds = array<i64: 32, 16>}, {pipeline_mode = #tpu.pipeline_mode<synchronous>, transform_indices = @transform_4, window_bounds = array<i64: 32, 16>}, {pipeline_mode = #tpu.pipeline_mode<synchronous>, transform_indices = @transform_5, window_bounds = array<i64: 64, 32>}, {transform_indices = @transform_6, window_bounds = array<i64: 1, 8, 32>}]} {
    %c8_i32 = arith.constant 8 : i32
    %0 = arith.muli %arg1, %c8_i32 : i32
    %c8_i32_0 = arith.constant 8 : i32
    %1 = arith.muli %arg2, %c8_i32_0 : i32
    %c0_i32 = arith.constant 0 : i32
    %2 = arith.cmpi eq, %arg2, %c0_i32 : i32
    %3 = arith.extui %2 : i1 to i32
    %c0_i32_1 = arith.constant 0 : i32
    %4 = arith.cmpi ne, %3, %c0_i32_1 : i32
    scf.if %4 {
      %c0 = arith.constant 0 : index
      %c0_6 = arith.constant 0 : index
      %c0_7 = arith.constant 0 : index
      %13 = vector.load %arg3[%c0, %c0_6, %c0_7] : memref<1x8x32xf32, #tpu.memory_space<vmem>>, vector<1x8x32xf32>
      %14 = vector.shape_cast %13 : vector<1x8x32xf32> to vector<8x32xf32>
      %15 = arith.mulf %14, %14 : vector<8x32xf32>
      %cst = arith.constant dense<0.000000e+00> : vector<8xf32>
      %16 = vector.multi_reduction <add>, %15, %cst [1] : vector<8x32xf32> to vector<8xf32>
      %17 = vector.shape_cast %16 : vector<8xf32> to vector<8x1xf32>
      %18 = math.sqrt %17 : vector<8x1xf32>
      %cst_8 = arith.constant 0.176776692 : f32
      %19 = vector.broadcast %cst_8 : f32 to vector<8x1xf32>
      %20 = arith.mulf %18, %19 : vector<8x1xf32>
      %cst_9 = arith.constant 9.99999993E-9 : f32
      %21 = vector.broadcast %cst_9 : f32 to vector<8x1xf32>
      %22 = arith.maximumf %20, %21 : vector<8x1xf32>
      %23 = vector.broadcast %22 : vector<8x1xf32> to vector<8x32xf32>
      %24 = arith.divf %14, %23 : vector<8x32xf32>
      %c0_10 = arith.constant 0 : index
      %c0_11 = arith.constant 0 : index
      %25 = vector.load %arg5[%c0_10, %c0_11] : memref<32x64xf32, #tpu.memory_space<vmem>>, vector<32x64xf32>
      %cst_12 = arith.constant dense<0.000000e+00> : vector<8x64xf32>
      %26 = tpu.matmul %24, %25, %cst_12 {dimension_numbers = #tpu.dot_dimension_numbers<[1], [0], [0], [1], [0, 0, 1, 1], [], []>} : vector<8x32xf32>, vector<32x64xf32>, vector<8x64xf32> -> vector<8x64xf32>
      %cst_13 = arith.constant 2.500000e-01 : f32
      %27 = vector.broadcast %cst_13 : f32 to vector<8x64xf32>
      %28 = arith.mulf %26, %27 : vector<8x64xf32>
      %29 = vector.extract_strided_slice %28 {offsets = [0, 0], sizes = [8, 16], strides = [1, 1]} : vector<8x64xf32> to vector<8x16xf32>
      %30 = vector.extract_strided_slice %28 {offsets = [0, 16], sizes = [8, 16], strides = [1, 1]} : vector<8x64xf32> to vector<8x16xf32>
      %31 = vector.extract_strided_slice %28 {offsets = [0, 32], sizes = [8, 16], strides = [1, 1]} : vector<8x64xf32> to vector<8x16xf32>
      %32 = vector.extract_strided_slice %28 {offsets = [0, 48], sizes = [8, 16], strides = [1, 1]} : vector<8x64xf32> to vector<8x16xf32>
      %33 = tpu.concatenate %29, %30, %31, %32 in 0 : vector<8x16xf32>, vector<8x16xf32>, vector<8x16xf32>, vector<8x16xf32> -> vector<32x16xf32>
      %c0_14 = arith.constant 0 : index
      %c0_15 = arith.constant 0 : index
      %34 = vector.load %arg10[%c0_14, %c0_15] : memref<32x16xf32, #tpu.memory_space<vmem>>, vector<32x16xf32>
      tpu.vector_store %arg10[%c0_14, %c0_15], %33 {strides = array<i32>} : memref<32x16xf32, #tpu.memory_space<vmem>>, vector<32x16xf32>,
      %cst_16 = arith.constant 0xFF800000 : f32
      %35 = vector.broadcast %cst_16 : f32 to vector<32x1xf32>
      %c0_17 = arith.constant 0 : index
      %c0_18 = arith.constant 0 : index
      %36 = vector.load %arg11[%c0_17, %c0_18] : memref<32x1xf32, #tpu.memory_space<vmem>>, vector<32x1xf32>
      tpu.vector_store %arg11[%c0_17, %c0_18], %35 {strides = array<i32>} : memref<32x1xf32, #tpu.memory_space<vmem>>, vector<32x1xf32>,
      %cst_19 = arith.constant 0.000000e+00 : f32
      %37 = vector.broadcast %cst_19 : f32 to vector<32x1xf32>
      %c0_20 = arith.constant 0 : index
      %c0_21 = arith.constant 0 : index
      %38 = vector.load %arg12[%c0_20, %c0_21] : memref<32x1xf32, #tpu.memory_space<vmem>>, vector<32x1xf32>
      tpu.vector_store %arg12[%c0_20, %c0_21], %37 {strides = array<i32>} : memref<32x1xf32, #tpu.memory_space<vmem>>, vector<32x1xf32>,
      %cst_22 = arith.constant 0.000000e+00 : f32
      %39 = vector.broadcast %cst_22 : f32 to vector<32x16xf32>
      %c0_23 = arith.constant 0 : index
      %c0_24 = arith.constant 0 : index
      %40 = vector.load %arg13[%c0_23, %c0_24] : memref<32x16xf32, #tpu.memory_space<vmem>>, vector<32x16xf32>
      tpu.vector_store %arg13[%c0_23, %c0_24], %39 {strides = array<i32>} : memref<32x16xf32, #tpu.memory_space<vmem>>, vector<32x16xf32>,
    } else {
    }
    %c8_i32_2 = arith.constant 8 : i32
    %5 = arith.addi %0, %c8_i32_2 : i32
    %c1_i32 = arith.constant 1 : i32
    %6 = arith.subi %5, %c1_i32 : i32
    %7 = arith.cmpi sle, %1, %6 : i32
    %8 = arith.extui %7 : i1 to i32
    %c0_i32_3 = arith.constant 0 : i32
    %9 = arith.cmpi ne, %8, %c0_i32_3 : i32
    scf.if %9 {
      %c0 = arith.constant 0 : index
      %c0_6 = arith.constant 0 : index
      %c0_7 = arith.constant 0 : index
      %13 = vector.load %arg4[%c0, %c0_6, %c0_7] : memref<1x8x32xf32, #tpu.memory_space<vmem>>, vector<1x8x32xf32>
      %14 = vector.shape_cast %13 : vector<1x8x32xf32> to vector<8x32xf32>
      %15 = arith.mulf %14, %14 : vector<8x32xf32>
      %cst = arith.constant dense<0.000000e+00> : vector<8xf32>
      %16 = vector.multi_reduction <add>, %15, %cst [1] : vector<8x32xf32> to vector<8xf32>
      %17 = vector.shape_cast %16 : vector<8xf32> to vector<8x1xf32>
      %18 = math.sqrt %17 : vector<8x1xf32>
      %cst_8 = arith.constant 0.176776692 : f32
      %19 = vector.broadcast %cst_8 : f32 to vector<8x1xf32>
      %20 = arith.mulf %18, %19 : vector<8x1xf32>
      %cst_9 = arith.constant 9.99999993E-9 : f32
      %21 = vector.broadcast %cst_9 : f32 to vector<8x1xf32>
      %22 = arith.maximumf %20, %21 : vector<8x1xf32>
      %23 = vector.broadcast %22 : vector<8x1xf32> to vector<8x32xf32>
      %24 = arith.divf %14, %23 : vector<8x32xf32>
      %c0_10 = arith.constant 0 : index
      %c0_11 = arith.constant 0 : index
      %25 = vector.load %arg6[%c0_10, %c0_11] : memref<32x16xf32, #tpu.memory_space<vmem>>, vector<32x16xf32>
      %cst_12 = arith.constant dense<0.000000e+00> : vector<8x16xf32>
      %26 = tpu.matmul %24, %25, %cst_12 {dimension_numbers = #tpu.dot_dimension_numbers<[1], [0], [0], [1], [0, 0, 1, 1], [], []>} : vector<8x32xf32>, vector<32x16xf32>, vector<8x16xf32> -> vector<8x16xf32>
      %c0_13 = arith.constant 0 : index
      %c0_14 = arith.constant 0 : index
      %27 = vector.load %arg7[%c0_13, %c0_14] : memref<32x16xf32, #tpu.memory_space<vmem>>, vector<32x16xf32>
      %cst_15 = arith.constant dense<0.000000e+00> : vector<8x16xf32>
      %28 = tpu.matmul %24, %27, %cst_15 {dimension_numbers = #tpu.dot_dimension_numbers<[1], [0], [0], [1], [0, 0, 1, 1], [], []>} : vector<8x32xf32>, vector<32x16xf32>, vector<8x16xf32> -> vector<8x16xf32>
      %c0_16 = arith.constant 0 : index
      %c0_17 = arith.constant 0 : index
      %29 = vector.load %arg10[%c0_16, %c0_17] : memref<32x16xf32, #tpu.memory_space<vmem>>, vector<32x16xf32>
      %30 = tpu.transpose %26, [1, 0] : vector<8x16xf32> -> vector<16x8xf32>
      %cst_18 = arith.constant dense<0.000000e+00> : vector<32x8xf32>
      %31 = tpu.matmul %29, %30, %cst_18 {dimension_numbers = #tpu.dot_dimension_numbers<[1], [0], [0], [1], [0, 0, 1, 1], [], []>} : vector<32x16xf32>, vector<16x8xf32>, vector<32x8xf32> -> vector<32x8xf32>
      %32 = tpu.iota {dimensions = array<i32: 0>} : vector<32x8xi32>
      %33 = tpu.iota {dimensions = array<i32: 1>} : vector<32x8xi32>
      %c8_i32_19 = arith.constant 8 : i32
      %c0_i32_20 = arith.constant 0 : i32
      %34 = arith.cmpi eq, %c8_i32_19, %c0_i32_20 : i32
      %c1_i32_21 = arith.constant 1 : i32
      %35 = arith.select %34, %c1_i32_21, %c8_i32_19 : i32
      %36 = vector.broadcast %35 : i32 to vector<32x8xi32>
      %37 = arith.remsi %32, %36 : vector<32x8xi32>
      %c0_i32_22 = arith.constant 0 : i32
      %38 = vector.broadcast %c0_i32_22 : i32 to vector<32x8xi32>
      %39 = arith.cmpi ne, %37, %38 : vector<32x8xi32>
      %c0_i32_23 = arith.constant 0 : i32
      %40 = vector.broadcast %c0_i32_23 : i32 to vector<32x8xi32>
      %41 = arith.cmpi slt, %37, %40 : vector<32x8xi32>
      %c0_i32_24 = arith.constant 0 : i32
      %42 = arith.cmpi slt, %35, %c0_i32_24 : i32
      %43 = vector.broadcast %42 : i1 to vector<32x8xi1>
      %44 = vector.broadcast %43 : vector<32x8xi1> to vector<32x8xi1>
      %45 = arith.xori %41, %44 : vector<32x8xi1>
      %46 = arith.andi %45, %39 : vector<32x8xi1>
      %47 = vector.broadcast %35 : i32 to vector<32x8xi32>
      %48 = arith.addi %37, %47 : vector<32x8xi32>
      %49 = arith.select %46, %48, %37 : vector<32x8xi1>, vector<32x8xi32>
      %50 = vector.broadcast %0 : i32 to vector<32x8xi32>
      %51 = arith.addi %50, %49 : vector<32x8xi32>
      %52 = vector.broadcast %1 : i32 to vector<32x8xi32>
      %53 = arith.addi %52, %33 : vector<32x8xi32>
      %54 = arith.cmpi sgt, %53, %51 : vector<32x8xi32>
      %cst_25 = arith.constant -2.38197633E+38 : f32
      %55 = vector.broadcast %cst_25 : f32 to vector<32x8xf32>
      %56 = arith.select %54, %55, %31 : vector<32x8xi1>, vector<32x8xf32>
      %c0_26 = arith.constant 0 : index
      %c0_27 = arith.constant 0 : index
      %57 = vector.load %arg11[%c0_26, %c0_27] : memref<32x1xf32, #tpu.memory_space<vmem>>, vector<32x1xf32>
      %cst_28 = arith.constant dense<0xFF800000> : vector<32xf32>
      %58 = vector.multi_reduction <maximumf>, %56, %cst_28 [1] : vector<32x8xf32> to vector<32xf32>
      %59 = vector.shape_cast %58 : vector<32xf32> to vector<32x1xf32>
      %60 = arith.maximumf %57, %59 : vector<32x1xf32>
      %61 = vector.broadcast %60 : vector<32x1xf32> to vector<32x8xf32>
      %62 = arith.subf %56, %61 : vector<32x8xf32>
      %63 = math.exp %62 : vector<32x8xf32>
      %cst_29 = arith.constant 0.000000e+00 : f32
      %64 = vector.broadcast %cst_29 : f32 to vector<32x8xf32>
      %65 = arith.select %54, %64, %63 : vector<32x8xi1>, vector<32x8xf32>
      %66 = arith.subf %57, %60 : vector<32x1xf32>
      %67 = math.exp %66 : vector<32x1xf32>
      %c0_30 = arith.constant 0 : index
      %c0_31 = arith.constant 0 : index
      %68 = vector.load %arg12[%c0_30, %c0_31] : memref<32x1xf32, #tpu.memory_space<vmem>>, vector<32x1xf32>
      %69 = arith.mulf %67, %68 : vector<32x1xf32>
      %cst_32 = arith.constant dense<0.000000e+00> : vector<32xf32>
      %70 = vector.multi_reduction <add>, %65, %cst_32 [1] : vector<32x8xf32> to vector<32xf32>
      %71 = vector.shape_cast %70 : vector<32xf32> to vector<32x1xf32>
      %72 = arith.addf %69, %71 : vector<32x1xf32>
      %c0_33 = arith.constant 0 : index
      %c0_34 = arith.constant 0 : index
      %73 = vector.load %arg12[%c0_33, %c0_34] : memref<32x1xf32, #tpu.memory_space<vmem>>, vector<32x1xf32>
      tpu.vector_store %arg12[%c0_33, %c0_34], %72 {strides = array<i32>} : memref<32x1xf32, #tpu.memory_space<vmem>>, vector<32x1xf32>,
      %c0_35 = arith.constant 0 : index
      %c0_36 = arith.constant 0 : index
      %74 = vector.load %arg13[%c0_35, %c0_36] : memref<32x16xf32, #tpu.memory_space<vmem>>, vector<32x16xf32>
      %75 = vector.broadcast %67 : vector<32x1xf32> to vector<32x16xf32>
      %76 = arith.mulf %75, %74 : vector<32x16xf32>
      %cst_37 = arith.constant dense<0.000000e+00> : vector<32x16xf32>
      %77 = tpu.matmul %65, %28, %cst_37 {dimension_numbers = #tpu.dot_dimension_numbers<[1], [0], [0], [1], [0, 0, 1, 1], [], []>} : vector<32x8xf32>, vector<8x16xf32>, vector<32x16xf32> -> vector<32x16xf32>
      %78 = arith.addf %76, %77 : vector<32x16xf32>
      %c0_38 = arith.constant 0 : index
      %c0_39 = arith.constant 0 : index
      %79 = vector.load %arg13[%c0_38, %c0_39] : memref<32x16xf32, #tpu.memory_space<vmem>>, vector<32x16xf32>
      tpu.vector_store %arg13[%c0_38, %c0_39], %78 {strides = array<i32>} : memref<32x16xf32, #tpu.memory_space<vmem>>, vector<32x16xf32>,
      %c0_40 = arith.constant 0 : index
      %c0_41 = arith.constant 0 : index
      %80 = vector.load %arg11[%c0_40, %c0_41] : memref<32x1xf32, #tpu.memory_space<vmem>>, vector<32x1xf32>
      tpu.vector_store %arg11[%c0_40, %c0_41], %60 {strides = array<i32>} : memref<32x1xf32, #tpu.memory_space<vmem>>, vector<32x1xf32>,
    } else {
    }
    %c0_i32_4 = arith.constant 0 : i32
    %10 = arith.cmpi eq, %arg2, %c0_i32_4 : i32
    %11 = arith.extui %10 : i1 to i32
    %c0_i32_5 = arith.constant 0 : i32
    %12 = arith.cmpi ne, %11, %c0_i32_5 : i32
    scf.if %12 {
      %c0 = arith.constant 0 : index
      %c0_6 = arith.constant 0 : index
      %13 = vector.load %arg13[%c0, %c0_6] : memref<32x16xf32, #tpu.memory_space<vmem>>, vector<32x16xf32>
      %c0_7 = arith.constant 0 : index
      %c0_8 = arith.constant 0 : index
      %14 = vector.load %arg12[%c0_7, %c0_8] : memref<32x1xf32, #tpu.memory_space<vmem>>, vector<32x1xf32>
      %15 = tpu.reciprocal %14 {approx = true} : vector<32x1xf32> -> vector<32x1xf32>
      %16 = vector.broadcast %15 : vector<32x1xf32> to vector<32x16xf32>
      %17 = arith.mulf %13, %16 : vector<32x16xf32>
      %18 = vector.extract_strided_slice %17 {offsets = [0, 0], sizes = [8, 16], strides = [1, 1]} : vector<32x16xf32> to vector<8x16xf32>
      %19 = vector.extract_strided_slice %17 {offsets = [8, 0], sizes = [8, 16], strides = [1, 1]} : vector<32x16xf32> to vector<8x16xf32>
      %20 = vector.extract_strided_slice %17 {offsets = [16, 0], sizes = [8, 16], strides = [1, 1]} : vector<32x16xf32> to vector<8x16xf32>
      %21 = vector.extract_strided_slice %17 {offsets = [24, 0], sizes = [8, 16], strides = [1, 1]} : vector<32x16xf32> to vector<8x16xf32>
      %22 = tpu.concatenate %18, %19, %20, %21 in 1 : vector<8x16xf32>, vector<8x16xf32>, vector<8x16xf32>, vector<8x16xf32> -> vector<8x64xf32>
      %c0_9 = arith.constant 0 : index
      %c0_10 = arith.constant 0 : index
      %23 = vector.load %arg8[%c0_9, %c0_10] : memref<64x32xf32, #tpu.memory_space<vmem>>, vector<64x32xf32>
      %cst = arith.constant dense<0.000000e+00> : vector<8x32xf32>
      %24 = tpu.matmul %22, %23, %cst {dimension_numbers = #tpu.dot_dimension_numbers<[1], [0], [0], [1], [0, 0, 1, 1], [], []>} : vector<8x64xf32>, vector<64x32xf32>, vector<8x32xf32> -> vector<8x32xf32>
      %c0_11 = arith.constant 0 : index
      %c0_12 = arith.constant 0 : index
      %c0_13 = arith.constant 0 : index
      %25 = vector.load %arg9[%c0_11, %c0_12, %c0_13] : memref<1x8x32xf32, #tpu.memory_space<vmem>>, vector<1x8x32xf32>
      %26 = vector.shape_cast %25 : vector<1x8x32xf32> to vector<8x32xf32>
      %27 = vector.shape_cast %24 : vector<8x32xf32> to vector<1x8x32xf32>
      tpu.vector_store %arg9[%c0_11, %c0_12, %c0_13], %27 {strides = array<i32>} : memref<1x8x32xf32, #tpu.memory_space<vmem>>, vector<1x8x32xf32>,
    } else {
    }
    return
  }
  func.func @transform_0(%arg0: i32, %arg1: i32, %arg2: i32) -> (i32, i32, i32) {
    %c0_i32 = arith.constant 0 : i32
    %c0_i32_0 = arith.constant 0 : i32
    return %arg0, %arg1, %c0_i32 : i32, i32, i32
  }
  func.func @transform_1(%arg0: i32, %arg1: i32, %arg2: i32) -> (i32, i32, i32) {
    %c0_i32 = arith.constant 0 : i32
    %c0_i32_0 = arith.constant 0 : i32
    return %arg0, %arg2, %c0_i32 : i32, i32, i32
  }
  func.func @transform_2(%arg0: i32, %arg1: i32, %arg2: i32) -> (i32, i32) {
    %c0_i32 = arith.constant 0 : i32
    %c0_i32_0 = arith.constant 0 : i32
    %c0_i32_1 = arith.constant 0 : i32
    return %c0_i32, %c0_i32_0 : i32, i32
  }
  func.func @transform_3(%arg0: i32, %arg1: i32, %arg2: i32) -> (i32, i32) {
    %c0_i32 = arith.constant 0 : i32
    %c0_i32_0 = arith.constant 0 : i32
    %c0_i32_1 = arith.constant 0 : i32
    return %c0_i32, %c0_i32_0 : i32, i32
  }
  func.func @transform_4(%arg0: i32, %arg1: i32, %arg2: i32) -> (i32, i32) {
    %c0_i32 = arith.constant 0 : i32
    %c0_i32_0 = arith.constant 0 : i32
    %c0_i32_1 = arith.constant 0 : i32
    return %c0_i32, %c0_i32_0 : i32, i32
  }
  func.func @transform_5(%arg0: i32, %arg1: i32, %arg2: i32) -> (i32, i32) {
    %c0_i32 = arith.constant 0 : i32
    %c0_i32_0 = arith.constant 0 : i32
    %c0_i32_1 = arith.constant 0 : i32
    return %c0_i32, %c0_i32_0 : i32, i32
  }
  func.func @transform_6(%arg0: i32, %arg1: i32, %arg2: i32) -> (i32, i32, i32) {
    %c0_i32 = arith.constant 0 : i32
    %c0_i32_0 = arith.constant 0 : i32
    return %arg0, %arg1, %c0_i32 : i32, i32, i32
  }
}

</mosaic_0001>

<llo_original>
// kernel: tpu_custom_call.1
$region0: #{tpu_custom_call.1}
  #allocation0 [shape = 'u32[]', space=smem, size = 0x4, offset = 0x4, fixed_abs, tag = 'smem constant byte address 0x4 - core index']
  #allocation1 [shape = 'u32[72,128]{1,0:T(1,128)}', space=vmem, size = 0x9000, scoped, tag = 'internal scratch']
  #allocation2 [shape = 'f32[32,16]{1,0:T(8,128)}', space=vmem, size = 0x4000, scoped, tag = 'scratch operand']
  #allocation3 [shape = 'f32[32,1]{1,0:T(8,128)}', space=vmem, size = 0x4000, scoped, tag = 'scratch operand']
  #allocation4 [shape = 'f32[32,1]{1,0:T(8,128)}', space=vmem, size = 0x4000, scoped, tag = 'scratch operand']
  #allocation5 [shape = 'f32[32,16]{1,0:T(8,128)}', space=vmem, size = 0x4000, scoped, tag = 'scratch operand']
  %s0 = inlined_call_operand.vmem [shape: f32[2,8,32], index: 0, kind: input, shape index: {}]
  %s1 = inlined_call_operand.vmem [shape: f32[2,8,32], index: 1, kind: input, shape index: {}]
  %s2 = inlined_call_operand.vmem [shape: f32[32,64], index: 2, kind: input, shape index: {}]
  %s3 = inlined_call_operand.vmem [shape: f32[32,16], index: 3, kind: input, shape index: {}]
  %s4 = inlined_call_operand.vmem [shape: f32[32,16], index: 4, kind: input, shape index: {}]
  %s5 = inlined_call_operand.vmem [shape: f32[64,32], index: 5, kind: input, shape index: {}]
  %s6 = inlined_call_operand.hbm [shape: f32[2,8,32], index: 6, kind: output, shape index: {}]
  %s7 = sld [smem:[#allocation0]]
  $region69: #{tpu_custom_call.1} parent=0
    _
  %s9 = ssub.s32 1, %s7
  %s10 = scalar_select 0, %s9, %s7
  $region1: #{tpu_custom_call.1} parent=0
    #allocation6 [shape = 'u8[8192]{0}', space=vmem, size = 0x2000, scoped, tag = 'output window, operand 0']
    #allocation7 [shape = 's32[2]{0}', space=sflag, size = 0x8, scoped, tag = 'scoped memory for tpu_custom_call.1']
    %11 = vsyncpa [#allocation7], 0
    %s12 = scalar_lea.sflag [#allocation7], 1
    %13 = vsyncpa %s12, 0
    loop: start=0, step=1, limit=4
    $region2: #{tpu_custom_call.1} parent=1 // loop_pre_header
      _
    $region3: #{tpu_custom_call.1} parent=1 // loop_header
      %s15 = sphi 0, %s19
      %p16 = scmp.ge.s32.totalorder %s15, 4
      %s22 = sphi 0, %s41
      %s23 = sphi 0, %s37
      %s24 = sphi 0, %s33
      %s25 = sphi 0, %s22
      %s26 = sphi 0, %s23
      %s27 = sphi 0, %s24
      %s28 = sphi 0, %s25
      %s29 = sphi 0, %s26
      %s30 = sphi 0, %s27
      %s46 = sphi 0, %s48
      %s49 = sphi 0, %s46
      %s50 = sphi 0, %s49
      %s66 = sphi 0, %s50
      %s74 = sphi 0, %s76
      %s77 = sphi 0, %s74
      %s78 = sphi 0, %s77
      %s94 = sphi 0, %s78
      %s98 = sphi 0, %s98
      %s100 = sphi 0, %s98
      %s101 = sphi 0, %s100
      %s115 = sphi 0, %s101
      %s119 = sphi 0, %s119
      %s121 = sphi 0, %s119
      %s122 = sphi 0, %s121
      %s136 = sphi 0, %s122
      %s140 = sphi 0, %s140
      %s142 = sphi 0, %s140
      %s143 = sphi 0, %s142
      %s157 = sphi 0, %s143
      %s161 = sphi 0, %s161
      %s163 = sphi 0, %s161
      %s164 = sphi 0, %s163
      %s178 = sphi 0, %s164
      %s186 = sphi 0, %s188
      %s189 = sphi 0, %s186
      %s190 = sphi 0, %s189
      %s206 = sphi 0, %s190
    $region4: #{tpu_custom_call.1} parent=1 // loop_header_branch
      %18 = sbr.rel (%p16) target = $region8
    $region5: #{tpu_custom_call.1} parent=1 // loop_body
      %s20 = ssub.s32 %s15, 1
      %s21 = ssub.s32 %s15, 2
      %s31 = sadd.s32 1, %s24
      %p32 = scmp.ge.s32.totalorder %s31, 1
      %s33 = scalar_select %p32, 0, %s31
      %s34 = sadd.s32 1, %s23
      %s35 = scalar_select %p32, %s34, %s23
      %p36 = scmp.ge.s32.totalorder %s35, 1
      %s37 = scalar_select %p36, 0, %s35
      %s38 = sadd.s32 1, %s22
      %s39 = scalar_select %p36, %s38, %s22
      %p40 = scmp.ge.s32.totalorder %s39, 2
      %s41 = scalar_select %p40, 0, %s39
      %s42 = ssub.s32 %s22, %s41
      %s43 = ssub.s32 %s23, %s37
      %s44 = sor.u32 %s42, %s43
      %p45 = scmp.eq.s32.totalorder %s44, 0
      %s47 = sadd.s32 %s46, 1
      %s48 = scalar_select %p45, %s46, %s47
      %p51 = pneg %p45
      %p52 = scmp.eq.s32.totalorder %s15, 1
      %p53 = por %p51, %p52
      %p54 = scmp.ne.s32.totalorder %s46, %s49
      %p55 = scmp.eq.s32.totalorder %s15, 0
      %p56 = por %p54, %p55
      %p57 = scmp.ne.s32.totalorder %s46, %s49
      %p58 = scmp.eq.s32.totalorder %s20, 1
      %p59 = por %p57, %p58
      %p60 = scmp.ne.s32.totalorder %s49, %s50
      %p61 = scmp.eq.s32.totalorder %s20, 0
      %p62 = por %p60, %p61
      %p63 = scmp.ne.s32.totalorder %s49, %s50
      %p64 = scmp.eq.s32.totalorder %s21, 1
      %p65 = por %p63, %p64
      %p67 = scmp.ne.s32.totalorder %s50, %s66
      %p68 = scmp.eq.s32.totalorder %s21, 0
      %p69 = por %p67, %p68
      %s70 = ssub.s32 %s22, %s41
      %s71 = ssub.s32 %s24, %s33
      %s72 = sor.u32 %s70, %s71
      %p73 = scmp.eq.s32.totalorder %s72, 0
      %s75 = sadd.s32 %s74, 1
      %s76 = scalar_select %p73, %s74, %s75
      %p79 = pneg %p73
      %p80 = scmp.eq.s32.totalorder %s15, 1
      %p81 = por %p79, %p80
      %p82 = scmp.ne.s32.totalorder %s74, %s77
      %p83 = scmp.eq.s32.totalorder %s15, 0
      %p84 = por %p82, %p83
      %p85 = scmp.ne.s32.totalorder %s74, %s77
      %p86 = scmp.eq.s32.totalorder %s20, 1
      %p87 = por %p85, %p86
      %p88 = scmp.ne.s32.totalorder %s77, %s78
      %p89 = scmp.eq.s32.totalorder %s20, 0
      %p90 = por %p88, %p89
      %p91 = scmp.ne.s32.totalorder %s77, %s78
      %p92 = scmp.eq.s32.totalorder %s21, 1
      %p93 = por %p91, %p92
      %p95 = scmp.ne.s32.totalorder %s78, %s94
      %p96 = scmp.eq.s32.totalorder %s21, 0
      %p97 = por %p95, %p96
      %s99 = sadd.s32 %s98, 1
      %p102 = scmp.eq.s32.totalorder %s15, 1
      %p103 = scmp.ne.s32.totalorder %s98, %s100
      %p104 = scmp.eq.s32.totalorder %s15, 0
      %p105 = por %p103, %p104
      %p106 = scmp.ne.s32.totalorder %s98, %s100
      %p107 = scmp.eq.s32.totalorder %s20, 1
      %p108 = por %p106, %p107
      %p109 = scmp.ne.s32.totalorder %s100, %s101
      %p110 = scmp.eq.s32.totalorder %s20, 0
      %p111 = por %p109, %p110
      %p112 = scmp.ne.s32.totalorder %s100, %s101
      %p113 = scmp.eq.s32.totalorder %s21, 1
      %p114 = por %p112, %p113
      %p116 = scmp.ne.s32.totalorder %s101, %s115
      %p117 = scmp.eq.s32.totalorder %s21, 0
      %p118 = por %p116, %p117
      %s120 = sadd.s32 %s119, 1
      %p123 = scmp.eq.s32.totalorder %s15, 1
      %p124 = scmp.ne.s32.totalorder %s119, %s121
      %p125 = scmp.eq.s32.totalorder %s15, 0
      %p126 = por %p124, %p125
      %p127 = scmp.ne.s32.totalorder %s119, %s121
      %p128 = scmp.eq.s32.totalorder %s20, 1
      %p129 = por %p127, %p128
      %p130 = scmp.ne.s32.totalorder %s121, %s122
      %p131 = scmp.eq.s32.totalorder %s20, 0
      %p132 = por %p130, %p131
      %p133 = scmp.ne.s32.totalorder %s121, %s122
      %p134 = scmp.eq.s32.totalorder %s21, 1
      %p135 = por %p133, %p134
      %p137 = scmp.ne.s32.totalorder %s122, %s136
      %p138 = scmp.eq.s32.totalorder %s21, 0
      %p139 = por %p137, %p138
      %s141 = sadd.s32 %s140, 1
      %p144 = scmp.eq.s32.totalorder %s15, 1
      %p145 = scmp.ne.s32.totalorder %s140, %s142
      %p146 = scmp.eq.s32.totalorder %s15, 0
      %p147 = por %p145, %p146
      %p148 = scmp.ne.s32.totalorder %s140, %s142
      %p149 = scmp.eq.s32.totalorder %s20, 1
      %p150 = por %p148, %p149
      %p151 = scmp.ne.s32.totalorder %s142, %s143
      %p152 = scmp.eq.s32.totalorder %s20, 0
      %p153 = por %p151, %p152
      %p154 = scmp.ne.s32.totalorder %s142, %s143
      %p155 = scmp.eq.s32.totalorder %s21, 1
      %p156 = por %p154, %p155
      %p158 = scmp.ne.s32.totalorder %s143, %s157
      %p159 = scmp.eq.s32.totalorder %s21, 0
      %p160 = por %p158, %p159
      %s162 = sadd.s32 %s161, 1
      %p165 = scmp.eq.s32.totalorder %s15, 1
      %p166 = scmp.ne.s32.totalorder %s161, %s163
      %p167 = scmp.eq.s32.totalorder %s15, 0
      %p168 = por %p166, %p167
      %p169 = scmp.ne.s32.totalorder %s161, %s163
      %p170 = scmp.eq.s32.totalorder %s20, 1
      %p171 = por %p169, %p170
      %p172 = scmp.ne.s32.totalorder %s163, %s164
      %p173 = scmp.eq.s32.totalorder %s20, 0
      %p174 = por %p172, %p173
      %p175 = scmp.ne.s32.totalorder %s163, %s164
      %p176 = scmp.eq.s32.totalorder %s21, 1
      %p177 = por %p175, %p176
      %p179 = scmp.ne.s32.totalorder %s164, %s178
      %p180 = scmp.eq.s32.totalorder %s21, 0
      %p181 = por %p179, %p180
      %s182 = ssub.s32 %s22, %s41
      %s183 = ssub.s32 %s23, %s37
      %s184 = sor.u32 %s182, %s183
      %p185 = scmp.eq.s32.totalorder %s184, 0
      %s187 = sadd.s32 %s186, 1
      %s188 = scalar_select %p185, %s186, %s187
      %p191 = pneg %p185
      %p192 = scmp.eq.s32.totalorder %s15, 1
      %p193 = por %p191, %p192
      %p194 = scmp.ne.s32.totalorder %s186, %s189
      %p195 = scmp.eq.s32.totalorder %s15, 0
      %p196 = por %p194, %p195
      %p197 = scmp.ne.s32.totalorder %s186, %s189
      %p198 = scmp.eq.s32.totalorder %s20, 1
      %p199 = por %p197, %p198
      %p200 = scmp.ne.s32.totalorder %s189, %s190
      %p201 = scmp.eq.s32.totalorder %s20, 0
      %p202 = por %p200, %p201
      %p203 = scmp.ne.s32.totalorder %s189, %s190
      %p204 = scmp.eq.s32.totalorder %s21, 1
      %p205 = por %p203, %p204
      %p207 = scmp.ne.s32.totalorder %s190, %s206
      %p208 = scmp.eq.s32.totalorder %s21, 0
      %p209 = por %p207, %p208
      %p210 = scmp.le.s32.totalorder 1, %s15
      %p211 = scmp.lt.s32.totalorder %s15, 3
      %p212 = pnand %p210, %p211
      %p213 = pneg %p212
      // Predicated region
      $region9: #{tpu_custom_call.1} parent=5 // pred_check
        _
      $region10: #{tpu_custom_call.1} parent=5 // pred_check_branch
        %215 = sbr.rel (%p212) target = $region12
      $region11: #{tpu_custom_call.1} parent=5 // pred_region
        %s216 = ssub.s32 %s15, 1
        // Predicated region
        $region13: #{tpu_custom_call.1} parent=11 // pred_check
          %p217 = pneg %p111
        $region14: #{tpu_custom_call.1} parent=11 // pred_check_branch
          %219 = sbr.rel (%p217) target = $region16
        $region15: #{tpu_custom_call.1} parent=11 // pred_region
          _
        $region16: #{tpu_custom_call.1} parent=11 // pred_fallthru
          _
        // Predicated region
        $region17: #{tpu_custom_call.1} parent=11 // pred_check
          %p220 = pneg %p132
        $region18: #{tpu_custom_call.1} parent=11 // pred_check_branch
          %222 = sbr.rel (%p220) target = $region20
        $region19: #{tpu_custom_call.1} parent=11 // pred_region
          _
        $region20: #{tpu_custom_call.1} parent=11 // pred_fallthru
          _
        // Predicated region
        $region21: #{tpu_custom_call.1} parent=11 // pred_check
          %p223 = pneg %p153
        $region22: #{tpu_custom_call.1} parent=11 // pred_check_branch
          %225 = sbr.rel (%p223) target = $region24
        $region23: #{tpu_custom_call.1} parent=11 // pred_region
          _
        $region24: #{tpu_custom_call.1} parent=11 // pred_fallthru
          _
        // Predicated region
        $region25: #{tpu_custom_call.1} parent=11 // pred_check
          %p226 = pneg %p174
        $region26: #{tpu_custom_call.1} parent=11 // pred_check_branch
          %228 = sbr.rel (%p226) target = $region28
        $region27: #{tpu_custom_call.1} parent=11 // pred_region
          _
        $region28: #{tpu_custom_call.1} parent=11 // pred_fallthru
          _
      $region12: #{tpu_custom_call.1} parent=5 // pred_fallthru
        _
      %p229 = scmp.lt.s32.totalorder %s15, 2
      // Predicated region
      $region29: #{tpu_custom_call.1} parent=5 // pred_check
        %p230 = pneg %p229
      $region30: #{tpu_custom_call.1} parent=5 // pred_check_branch
        %232 = sbr.rel (%p230) target = $region32
      $region31: #{tpu_custom_call.1} parent=5 // pred_region
        // Predicated region
        $region33: #{tpu_custom_call.1} parent=31 // pred_check
          %p233 = pneg %p56
        $region34: #{tpu_custom_call.1} parent=31 // pred_check_branch
          %235 = sbr.rel (%p233) target = $region36
        $region35: #{tpu_custom_call.1} parent=31 // pred_region
          %p236 = scmp.lt.s32.totalorder %s22, 1
          %s237 = scalar_select %p236, %s22, 1
          %p238 = scmp.lt.s32.totalorder %s23, 0
          %s239 = scalar_select %p238, %s23, 0
          %s240 = sadd.s32 %s239, %s237
          %s241 = smul.addr %s240, 8
          %s242 = scalar_lea.vmem %s0, %s241
        $region36: #{tpu_custom_call.1} parent=31 // pred_fallthru
          _
        // Predicated region
        $region37: #{tpu_custom_call.1} parent=31 // pred_check
          %p243 = pneg %p84
        $region38: #{tpu_custom_call.1} parent=31 // pred_check_branch
          %245 = sbr.rel (%p243) target = $region40
        $region39: #{tpu_custom_call.1} parent=31 // pred_region
          %p246 = scmp.lt.s32.totalorder %s22, 1
          %s247 = scalar_select %p246, %s22, 1
          %p248 = scmp.lt.s32.totalorder %s24, 0
          %s249 = scalar_select %p248, %s24, 0
          %s250 = sadd.s32 %s249, %s247
          %s251 = smul.addr %s250, 8
          %s252 = scalar_lea.vmem %s1, %s251
        $region40: #{tpu_custom_call.1} parent=31 // pred_fallthru
          _
      $region32: #{tpu_custom_call.1} parent=5 // pred_fallthru
        _
      %p253 = scmp.le.s32.totalorder 1, %s15
      %p254 = scmp.lt.s32.totalorder %s15, 3
      %p255 = pnand %p253, %p254
      %p256 = pneg %p255
      // Predicated region
      $region41: #{tpu_custom_call.1} parent=5 // pred_check
        _
      $region42: #{tpu_custom_call.1} parent=5 // pred_check_branch
        %258 = sbr.rel (%p255) target = $region44
      $region43: #{tpu_custom_call.1} parent=5 // pred_region
        %s259 = ssub.s32 %s15, 1
        %p260 = scmp.lt.s32.totalorder %s25, 1
        %s261 = scalar_select %p260, %s25, 1
        %p262 = scmp.lt.s32.totalorder %s26, 0
        %s263 = scalar_select %p262, %s26, 0
        %s264 = sadd.s32 %s263, %s261
        %s265 = smul.addr %s264, 8
        %s266 = scalar_lea.vmem %s0, %s265
        %p267 = pneg %p62
        %p268 = pneg %p59
        %p269 = scmp.lt.s32.totalorder %s25, 1
        %s270 = scalar_select %p269, %s25, 1
        %p271 = scmp.lt.s32.totalorder %s27, 0
        %s272 = scalar_select %p271, %s27, 0
        %s273 = sadd.s32 %s272, %s270
        %s274 = smul.addr %s273, 8
        %s275 = scalar_lea.vmem %s1, %s274
        %p276 = pneg %p90
        %p277 = pneg %p87
        %p278 = pneg %p111
        %p279 = pneg %p108
        %p280 = pneg %p132
        %p281 = pneg %p129
        %p282 = pneg %p153
        %p283 = pneg %p150
        %p284 = pneg %p174
        %p285 = pneg %p171
        %p286 = pneg %p202
        %p287 = pneg %p199
        %s288 = sand.u32 %s189, 1
        %s289 = scalar_lea.sflag [#allocation7], %s288
        %s290 = sand.u32 %s189, 1
        %s291 = smul.addr %s290, 8
        %s292 = scalar_lea.vmem [#allocation6], %s291
        %p293 = scmp.lt.s32.totalorder %s25, 1
        %s294 = scalar_select %p293, %s25, 1
        %p295 = scmp.lt.s32.totalorder %s26, 0
        %s296 = scalar_select %p295, %s26, 0
        %s297 = sadd.s32 %s296, %s294
        %s298 = smul.addr %s297, 8
        %s299 = scalar_lea.vmem %s0, %s298
        %p300 = scmp.lt.s32.totalorder %s25, 1
        %s301 = scalar_select %p300, %s25, 1
        %p302 = scmp.lt.s32.totalorder %s27, 0
        %s303 = scalar_select %p302, %s27, 0
        %s304 = sadd.s32 %s303, %s301
        %s305 = smul.addr %s304, 8
        %s306 = scalar_lea.vmem %s1, %s305
        %s307 = smul.u32 %s26, 8
        %s308 = smul.u32 %s27, 8
        %p309 = scmp.eq.s32.totalorder %s27, 0
        // Predicated region
        $region45: #{tpu_custom_call.1} parent=43 // pred_check
          %p310 = pneg %p309
        $region46: #{tpu_custom_call.1} parent=43 // pred_check_branch
          %312 = sbr.rel (%p310) target = $region48
        $region47: #{tpu_custom_call.1} parent=43 // pred_region
          %v313 = vld [vmem:[%s299] sm:$0xff]
          %v314 = vmul.f32 %v313, %v313
          %vm315 = vcmask 261120
          %v316 = vsel %vm315, %v314, 0.0
          %317 = vadd.xlane.f32.xlu0 %v316
          %v318 = vpop.xlane.xlu0 %317
          %v319 = vrsqrt.pop %v318
          %v320 = vmul.f32 %v319, %v318
          %v321 = vmul.f32 %v320, %v319
          %v322 = vmul.f32 0.5, %v321
          %v323 = vsub.f32 1.5, %v322
          %v324 = vmul.f32 %v319, %v323
          %v325 = vmul.f32 %v318, %v324
          %vm326 = vcmp.eq.f32.partialorder %v318, inf
          %v327 = vsel %vm326, %v318, %v325
          %vm328 = vcmp.eq.f32.partialorder %v318, 0.0
          %v329 = vand.u32 %v318, 2147483648
          %v330 = vsel %vm328, %v329, %v327
          %v331 = vmul.f32 %v330, 0.17677669
          %v332 = vmax.f32 %v331, 1e-08
          %v333 = vrcp.pop %v332
          %v334 = vmul.f32 %v332, %v333
          %v335 = vsub.f32 1.0, %v334
          %v336 = vmul.f32 %v333, %v335
          %v337 = vadd.f32 %v333, %v336
          %vm338 = vweird.f32 %v332
          %vm339 = vweird.f32 %v333
          %vm340 = vmor %vm338, %vm339
          %v341 = vsel %vm340, %v333, %v337
          %v342 = vand.u32 2147483647, %v332
          %vm343 = vcmp.eq.f32.partialorder %v342, 8.507059e+37
          %v344 = vand.u32 %v332, 2147483648
          %v345 = vor.u32 1.1754944e-38, %v344
          %v346 = vsel %vm343, %v345, %v341
          %v347 = vmul.f32 %v313, %v346
          %v348 = vld [vmem:[%s2] sm:$0xff]
          %v349 = vld [vmem:[%s2 + $0x8] sm:$0xff]
          %v350 = vld [vmem:[%s2 + $0x10] sm:$0xff]
          %v351 = vld [vmem:[%s2 + $0x18] sm:$0xff]
          %v353 = vsel %vm315, %v347, 0
          %355 = vmatpush.msra.mxu0 0.0
          %356 = vmatpush.msra.mxu0 0.0
          %357 = vmatpush.msra.mxu0 0.0
          %358 = vmatpush.msra.mxu0 0.0
          %359 = vmatpush.msra.mxu0 0.0
          %360 = vmatpush.msra.mxu0 0.0
          %361 = vmatpush.msra.mxu0 0.0
          %362 = vmatpush.msra.mxu0 0.0
          %363 = vmatpush.msra.mxu0 0.0
          %364 = vmatpush.msra.mxu0 0.0
          %365 = vmatpush.msra.mxu0 0.0
          %366 = vmatpush.msra.mxu0 0.0
          %367 = vmatpush.msra.mxu0 %v351
          %368 = vmatpush.msra.mxu0 %v350
          %369 = vmatpush.msra.mxu0 %v349
          %370 = vmatpush.msra.mxu0 %v348
          %371 = vmatmul.f32.gmra.mxu0 %v353
          %v372 = vpop.f32.mrf.mxu0
          %v373 = vadd.f32 0.0, %v372
          %374 = vdwg.mxu0
          %v375 = vmul.f32 %v373, 0.25
          %377 = vrot.lane.b32.xlu0 %v375, 112
          %v378 = vpop.permute.xlu0 %377
          %380 = vrot.lane.b32.xlu0 %v375, 96
          %v381 = vpop.permute.xlu0 %380
          %383 = vrot.lane.b32.xlu0 %v375, 80
          %v384 = vpop.permute.xlu0 %383
          %vm386 = vcmask 130048
          %387 = vst.msk [vmem:[#allocation2] sm:$0xff] %vm386, %v375
          %388 = vst.msk [vmem:[#allocation2 + $0x8] sm:$0xff] %vm386, %v378
          %389 = vst.msk [vmem:[#allocation2 + $0x10] sm:$0xff] %vm386, %v381
          %390 = vst.msk [vmem:[#allocation2 + $0x18] sm:$0xff] %vm386, %v384
          %vm391 = vcmask 7168
          %392 = vst.msk [vmem:[#allocation3] sm:$0xff] %vm391, -inf
          %393 = vst.msk [vmem:[#allocation3 + $0x8] sm:$0xff] %vm391, -inf
          %394 = vst.msk [vmem:[#allocation3 + $0x10] sm:$0xff] %vm391, -inf
          %395 = vst.msk [vmem:[#allocation3 + $0x18] sm:$0xff] %vm391, -inf
          %396 = vst.msk [vmem:[#allocation4] sm:$0xff] %vm391, 0.0
          %397 = vst.msk [vmem:[#allocation4 + $0x8] sm:$0xff] %vm391, 0.0
          %398 = vst.msk [vmem:[#allocation4 + $0x10] sm:$0xff] %vm391, 0.0
          %399 = vst.msk [vmem:[#allocation4 + $0x18] sm:$0xff] %vm391, 0.0
          %400 = vst.msk [vmem:[#allocation5] sm:$0xff] %vm386, 0.0
          %401 = vst.msk [vmem:[#allocation5 + $0x8] sm:$0xff] %vm386, 0.0
          %402 = vst.msk [vmem:[#allocation5 + $0x10] sm:$0xff] %vm386, 0.0
          %403 = vst.msk [vmem:[#allocation5 + $0x18] sm:$0xff] %vm386, 0.0
        $region48: #{tpu_custom_call.1} parent=43 // pred_fallthru
          _
        %s404 = sadd.s32 %s307, 7
        %p405 = scmp.le.s32.totalorder %s308, %s404
        // Predicated region
        $region49: #{tpu_custom_call.1} parent=43 // pred_check
          %p406 = pneg %p405
        $region50: #{tpu_custom_call.1} parent=43 // pred_check_branch
          %408 = sbr.rel (%p406) target = $region52
        $region51: #{tpu_custom_call.1} parent=43 // pred_region
          %v409 = vld [vmem:[%s306] sm:$0xff]
          %v410 = vmul.f32 %v409, %v409
          %vm411 = vcmask 261120
          %v412 = vsel %vm411, %v410, 0.0
          %413 = vadd.xlane.f32.xlu0 %v412
          %v414 = vpop.xlane.xlu0 %413
          %v415 = vrsqrt.pop %v414
          %v416 = vmul.f32 %v415, %v414
          %v417 = vmul.f32 %v416, %v415
          %v418 = vmul.f32 0.5, %v417
          %v419 = vsub.f32 1.5, %v418
          %v420 = vmul.f32 %v415, %v419
          %v421 = vmul.f32 %v414, %v420
          %vm422 = vcmp.eq.f32.partialorder %v414, inf
          %v423 = vsel %vm422, %v414, %v421
          %vm424 = vcmp.eq.f32.partialorder %v414, 0.0
          %v425 = vand.u32 %v414, 2147483648
          %v426 = vsel %vm424, %v425, %v423
          %v427 = vmul.f32 %v426, 0.17677669
          %v428 = vmax.f32 %v427, 1e-08
          %v429 = vrcp.pop %v428
          %v430 = vmul.f32 %v428, %v429
          %v431 = vsub.f32 1.0, %v430
          %v432 = vmul.f32 %v429, %v431
          %v433 = vadd.f32 %v429, %v432
          %vm434 = vweird.f32 %v428
          %vm435 = vweird.f32 %v429
          %vm436 = vmor %vm434, %vm435
          %v437 = vsel %vm436, %v429, %v433
          %v438 = vand.u32 2147483647, %v428
          %vm439 = vcmp.eq.f32.partialorder %v438, 8.507059e+37
          %v440 = vand.u32 %v428, 2147483648
          %v441 = vor.u32 1.1754944e-38, %v440
          %v442 = vsel %vm439, %v441, %v437
          %v443 = vmul.f32 %v409, %v442
          %v444 = vld [vmem:[%s3] sm:$0xff]
          %v445 = vld [vmem:[%s3 + $0x8] sm:$0xff]
          %v446 = vld [vmem:[%s3 + $0x10] sm:$0xff]
          %v447 = vld [vmem:[%s3 + $0x18] sm:$0xff]
          %v449 = vsel %vm411, %v443, 0
          %451 = vmatpush.msra.mxu0 0.0
          %452 = vmatpush.msra.mxu0 0.0
          %453 = vmatpush.msra.mxu0 0.0
          %454 = vmatpush.msra.mxu0 0.0
          %455 = vmatpush.msra.mxu0 0.0
          %456 = vmatpush.msra.mxu0 0.0
          %457 = vmatpush.msra.mxu0 0.0
          %458 = vmatpush.msra.mxu0 0.0
          %459 = vmatpush.msra.mxu0 0.0
          %460 = vmatpush.msra.mxu0 0.0
          %461 = vmatpush.msra.mxu0 0.0
          %462 = vmatpush.msra.mxu0 0.0
          %463 = vmatpush.msra.mxu0 %v447
          %464 = vmatpush.msra.mxu0 %v446
          %465 = vmatpush.msra.mxu0 %v445
          %466 = vmatpush.msra.mxu0 %v444
          %467 = vmatmul.f32.gmra.mxu0 %v449
          %v468 = vpop.f32.mrf.mxu0
          %v469 = vadd.f32 0.0, %v468
          %470 = vdwg.mxu0
          %v471 = vld [vmem:[%s4] sm:$0xff]
          %v472 = vld [vmem:[%s4 + $0x8] sm:$0xff]
          %v473 = vld [vmem:[%s4 + $0x10] sm:$0xff]
          %v474 = vld [vmem:[%s4 + $0x18] sm:$0xff]
          %475 = vmatpush.msra.mxu0 0.0
          %476 = vmatpush.msra.mxu0 0.0
          %477 = vmatpush.msra.mxu0 0.0
          %478 = vmatpush.msra.mxu0 0.0
          %479 = vmatpush.msra.mxu0 0.0
          %480 = vmatpush.msra.mxu0 0.0
          %481 = vmatpush.msra.mxu0 0.0
          %482 = vmatpush.msra.mxu0 0.0
          %483 = vmatpush.msra.mxu0 0.0
          %484 = vmatpush.msra.mxu0 0.0
          %485 = vmatpush.msra.mxu0 0.0
          %486 = vmatpush.msra.mxu0 0.0
          %487 = vmatpush.msra.mxu0 %v474
          %488 = vmatpush.msra.mxu0 %v473
          %489 = vmatpush.msra.mxu0 %v472
          %490 = vmatpush.msra.mxu0 %v471
          %491 = vmatmul.f32.gmra.mxu0 %v449
          %v492 = vpop.f32.mrf.mxu0
          %v493 = vadd.f32 0.0, %v492
          %494 = vdwg.mxu0
          %v495 = vld [vmem:[#allocation2] sm:$0xff]
          %v496 = vld [vmem:[#allocation2 + $0x8] sm:$0xff]
          %v497 = vld [vmem:[#allocation2 + $0x10] sm:$0xff]
          %v498 = vld [vmem:[#allocation2 + $0x18] sm:$0xff]
          %vm499 = vcmask 130048
          %v501 = vsel %vm499, %v495, 0
          %v504 = vsel %vm499, %v496, 0
          %v507 = vsel %vm499, %v497, 0
          %v510 = vsel %vm499, %v498, 0
          %v513 = vsel %vm499, %v469, 0
          %515 = vmatpush.xpose.msra.mxu0 0.0
          %516 = vmatpush.xpose.msra.mxu0 0.0
          %517 = vmatpush.xpose.msra.mxu0 0.0
          %518 = vmatpush.xpose.msra.mxu0 0.0
          %519 = vmatpush.xpose.msra.mxu0 0.0
          %520 = vmatpush.xpose.msra.mxu0 0.0
          %521 = vmatpush.xpose.msra.mxu0 0.0
          %522 = vmatpush.xpose.msra.mxu0 0.0
          %523 = vmatpush.xpose.msra.mxu0 0.0
          %524 = vmatpush.xpose.msra.mxu0 0.0
          %525 = vmatpush.xpose.msra.mxu0 0.0
          %526 = vmatpush.xpose.msra.mxu0 0.0
          %527 = vmatpush.xpose.msra.mxu0 0.0
          %528 = vmatpush.xpose.msra.mxu0 0.0
          %529 = vmatpush.xpose.msra.mxu0 0.0
          %530 = vmatpush.xpose.msra.mxu0 %v513
          %531 = vmatmul.f32.gmra.mxu0 %v501
          %v532 = vpop.f32.mrf.mxu0
          %v533 = vadd.f32 0.0, %v532
          %534 = vmatmul.f32.gmra.mxu0 %v504
          %v535 = vpop.f32.mrf.mxu0
          %v536 = vadd.f32 0.0, %v535
          %537 = vmatmul.f32.gmra.mxu0 %v507
          %v538 = vpop.f32.mrf.mxu0
          %v539 = vadd.f32 0.0, %v538
          %540 = vmatmul.f32.gmra.mxu0 %v510
          %v541 = vpop.f32.mrf.mxu0
          %v542 = vadd.f32 0.0, %v541
          %543 = vdwg.mxu0
          %v544 = vlaneseq
          %v545 = vshrl.u32 %v544, 7
          %v546 = vadd.s32 %v545, 8
          %v547 = vadd.s32 %v545, 16
          %v548 = vadd.s32 %v545, 24
          %v549 = vlaneseq
          %v550 = vand.u32 %v549, 127
          %vm551 = vcmp.lt.s32.totalorder %v545, 0
          %v552 = vsub.s32 0, %v545
          %v553 = vsel %vm551, %v552, %v545
          %v554 = vshrl.u32 %v553, 3
          %v555 = vand.u32 %v553, 7
          %v556 = vsub.s32 0, %v555
          %v557 = vsel %vm551, %v556, %v555
          %vm558 = vcmp.lt.s32.totalorder %v546, 0
          %v559 = vsub.s32 0, %v546
          %v560 = vsel %vm558, %v559, %v546
          %v561 = vshrl.u32 %v560, 3
          %v562 = vand.u32 %v560, 7
          %v563 = vsub.s32 0, %v562
          %v564 = vsel %vm558, %v563, %v562
          %vm565 = vcmp.lt.s32.totalorder %v547, 0
          %v566 = vsub.s32 0, %v547
          %v567 = vsel %vm565, %v566, %v547
          %v568 = vshrl.u32 %v567, 3
          %v569 = vand.u32 %v567, 7
          %v570 = vsub.s32 0, %v569
          %v571 = vsel %vm565, %v570, %v569
          %vm572 = vcmp.lt.s32.totalorder %v548, 0
          %v573 = vsub.s32 0, %v548
          %v574 = vsel %vm572, %v573, %v548
          %v575 = vshrl.u32 %v574, 3
          %v576 = vand.u32 %v574, 7
          %v577 = vsub.s32 0, %v576
          %v578 = vsel %vm572, %v577, %v576
          %vm579 = vcmp.ne.s32.totalorder %v557, 0
          %vm580 = vcmp.ne.s32.totalorder %v564, 0
          %vm581 = vcmp.ne.s32.totalorder %v571, 0
          %vm582 = vcmp.ne.s32.totalorder %v578, 0
          %vm583 = vcmp.lt.s32.totalorder %v557, 0
          %vm584 = vcmp.lt.s32.totalorder %v564, 0
          %vm585 = vcmp.lt.s32.totalorder %v571, 0
          %vm586 = vcmp.lt.s32.totalorder %v578, 0
          %vm587 = vmand %vm583, %vm579
          %vm588 = vmand %vm584, %vm580
          %vm589 = vmand %vm585, %vm581
          %vm590 = vmand %vm586, %vm582
          %v591 = vadd.s32 %v557, 8
          %v592 = vadd.s32 %v564, 8
          %v593 = vadd.s32 %v571, 8
          %v594 = vadd.s32 %v578, 8
          %v595 = vsel %vm587, %v591, %v557
          %v596 = vsel %vm588, %v592, %v564
          %v597 = vsel %vm589, %v593, %v571
          %v598 = vsel %vm590, %v594, %v578
          %v599 = vstv %s307
          %v600 = vadd.s32 %v599, %v595
          %v601 = vadd.s32 %v599, %v596
          %v602 = vadd.s32 %v599, %v597
          %v603 = vadd.s32 %v599, %v598
          %v604 = vstv %s308
          %v605 = vadd.s32 %v604, %v550
          %vm606 = vcmp.gt.s32.totalorder %v605, %v600
          %vm607 = vcmp.gt.s32.totalorder %v605, %v601
          %vm608 = vcmp.gt.s32.totalorder %v605, %v602
          %vm609 = vcmp.gt.s32.totalorder %v605, %v603
          %v610 = vsel %vm606, -2.3819763e+38, %v533
          %v611 = vsel %vm607, -2.3819763e+38, %v536
          %v612 = vsel %vm608, -2.3819763e+38, %v539
          %v613 = vsel %vm609, -2.3819763e+38, %v542
          %v614 = vld [vmem:[#allocation3] sm:$0xff]
          %v615 = vld [vmem:[#allocation3 + $0x8] sm:$0xff]
          %v616 = vld [vmem:[#allocation3 + $0x10] sm:$0xff]
          %v617 = vld [vmem:[#allocation3 + $0x18] sm:$0xff]
          %vm618 = vcmask 64512
          %v619 = vsel %vm618, %v610, -inf
          %620 = vmax.xlane.f32.xlu0 %v619
          %v621 = vpop.xlane.xlu0 %620
          %v622 = vsel %vm618, %v611, -inf
          %623 = vmax.xlane.f32.xlu0 %v622
          %v624 = vpop.xlane.xlu0 %623
          %v625 = vsel %vm618, %v612, -inf
          %626 = vmax.xlane.f32.xlu0 %v625
          %v627 = vpop.xlane.xlu0 %626
          %v628 = vsel %vm618, %v613, -inf
          %629 = vmax.xlane.f32.xlu0 %v628
          %v630 = vpop.xlane.xlu0 %629
          %v631 = vmax.f32 %v614, %v621
          %v632 = vmax.f32 %v615, %v624
          %v633 = vmax.f32 %v616, %v627
          %v634 = vmax.f32 %v617, %v630
          %636 = vset.pattern.permute.xlu0 0
          %637 = vperm.xlu0 %636, %v631
          %v638 = vpop.permute.xlu0 %637
          %641 = vset.pattern.permute.xlu0 0
          %642 = vperm.xlu0 %641, %v632
          %v643 = vpop.permute.xlu0 %642
          %646 = vset.pattern.permute.xlu0 0
          %647 = vperm.xlu0 %646, %v633
          %v648 = vpop.permute.xlu0 %647
          %651 = vset.pattern.permute.xlu0 0
          %652 = vperm.xlu0 %651, %v634
          %v653 = vpop.permute.xlu0 %652
          %v655 = vsub.f32 %v610, %v638
          %v656 = vsub.f32 %v611, %v643
          %v657 = vsub.f32 %v612, %v648
          %v658 = vsub.f32 %v613, %v653
          %v659 = vmul.f32 %v655, 1.442695
          %v660 = vpow.pop %v659
          %v661 = vmul.f32 %v656, 1.442695
          %v662 = vpow.pop %v661
          %v663 = vmul.f32 %v657, 1.442695
          %v664 = vpow.pop %v663
          %v665 = vmul.f32 %v658, 1.442695
          %v666 = vpow.pop %v665
          %v667 = vsel %vm606, 0.0, %v660
          %v668 = vsel %vm607, 0.0, %v662
          %v669 = vsel %vm608, 0.0, %v664
          %v670 = vsel %vm609, 0.0, %v666
          %v671 = vsub.f32 %v614, %v631
          %v672 = vsub.f32 %v615, %v632
          %v673 = vsub.f32 %v616, %v633
          %v674 = vsub.f32 %v617, %v634
          %v675 = vmul.f32 %v671, 1.442695
          %v676 = vpow.pop %v675
          %v677 = vmul.f32 %v672, 1.442695
          %v678 = vpow.pop %v677
          %v679 = vmul.f32 %v673, 1.442695
          %v680 = vpow.pop %v679
          %v681 = vmul.f32 %v674, 1.442695
          %v682 = vpow.pop %v681
          %v683 = vld [vmem:[#allocation4] sm:$0xff]
          %v684 = vld [vmem:[#allocation4 + $0x8] sm:$0xff]
          %v685 = vld [vmem:[#allocation4 + $0x10] sm:$0xff]
          %v686 = vld [vmem:[#allocation4 + $0x18] sm:$0xff]
          %v687 = vmul.f32 %v676, %v683
          %v688 = vmul.f32 %v678, %v684
          %v689 = vmul.f32 %v680, %v685
          %v690 = vmul.f32 %v682, %v686
          %v691 = vsel %vm618, %v667, 0.0
          %692 = vadd.xlane.f32.xlu0 %v691
          %v693 = vpop.xlane.xlu0 %692
          %v694 = vsel %vm618, %v668, 0.0
          %695 = vadd.xlane.f32.xlu0 %v694
          %v696 = vpop.xlane.xlu0 %695
          %v697 = vsel %vm618, %v669, 0.0
          %698 = vadd.xlane.f32.xlu0 %v697
          %v699 = vpop.xlane.xlu0 %698
          %v700 = vsel %vm618, %v670, 0.0
          %701 = vadd.xlane.f32.xlu0 %v700
          %v702 = vpop.xlane.xlu0 %701
          %v703 = vadd.f32 %v687, %v693
          %v704 = vadd.f32 %v688, %v696
          %v705 = vadd.f32 %v689, %v699
          %v706 = vadd.f32 %v690, %v702
          %vm707 = vcmask 7168
          %708 = vst.msk [vmem:[#allocation4] sm:$0xff] %vm707, %v703
          %709 = vst.msk [vmem:[#allocation4 + $0x8] sm:$0xff] %vm707, %v704
          %710 = vst.msk [vmem:[#allocation4 + $0x10] sm:$0xff] %vm707, %v705
          %711 = vst.msk [vmem:[#allocation4 + $0x18] sm:$0xff] %vm707, %v706
          %v712 = vld [vmem:[#allocation5] sm:$0xff]
          %v713 = vld [vmem:[#allocation5 + $0x8] sm:$0xff]
          %v714 = vld [vmem:[#allocation5 + $0x10] sm:$0xff]
          %v715 = vld [vmem:[#allocation5 + $0x18] sm:$0xff]
          %717 = vset.pattern.permute.xlu0 0
          %718 = vperm.xlu0 %717, %v676
          %v719 = vpop.permute.xlu0 %718
          %722 = vset.pattern.permute.xlu0 0
          %723 = vperm.xlu0 %722, %v678
          %v724 = vpop.permute.xlu0 %723
          %727 = vset.pattern.permute.xlu0 0
          %728 = vperm.xlu0 %727, %v680
          %v729 = vpop.permute.xlu0 %728
          %732 = vset.pattern.permute.xlu0 0
          %733 = vperm.xlu0 %732, %v682
          %v734 = vpop.permute.xlu0 %733
          %v736 = vmul.f32 %v719, %v712
          %v737 = vmul.f32 %v724, %v713
          %v738 = vmul.f32 %v729, %v714
          %v739 = vmul.f32 %v734, %v715
          %v741 = vsel %vm618, %v667, 0
          %v744 = vsel %vm618, %v668, 0
          %v747 = vsel %vm618, %v669, 0
          %v750 = vsel %vm618, %v670, 0
          %752 = vmatpush.msra.mxu0 0.0
          %753 = vmatpush.msra.mxu0 0.0
          %754 = vmatpush.msra.mxu0 0.0
          %755 = vmatpush.msra.mxu0 0.0
          %756 = vmatpush.msra.mxu0 0.0
          %757 = vmatpush.msra.mxu0 0.0
          %758 = vmatpush.msra.mxu0 0.0
          %759 = vmatpush.msra.mxu0 0.0
          %760 = vmatpush.msra.mxu0 0.0
          %761 = vmatpush.msra.mxu0 0.0
          %762 = vmatpush.msra.mxu0 0.0
          %763 = vmatpush.msra.mxu0 0.0
          %764 = vmatpush.msra.mxu0 0.0
          %765 = vmatpush.msra.mxu0 0.0
          %766 = vmatpush.msra.mxu0 0.0
          %767 = vmatpush.msra.mxu0 %v493
          %768 = vmatmul.f32.gmra.mxu0 %v741
          %v769 = vpop.f32.mrf.mxu0
          %v770 = vadd.f32 0.0, %v769
          %771 = vmatmul.f32.gmra.mxu0 %v744
          %v772 = vpop.f32.mrf.mxu0
          %v773 = vadd.f32 0.0, %v772
          %774 = vmatmul.f32.gmra.mxu0 %v747
          %v775 = vpop.f32.mrf.mxu0
          %v776 = vadd.f32 0.0, %v775
          %777 = vmatmul.f32.gmra.mxu0 %v750
          %v778 = vpop.f32.mrf.mxu0
          %v779 = vadd.f32 0.0, %v778
          %780 = vdwg.mxu0
          %v781 = vadd.f32 %v736, %v770
          %v782 = vadd.f32 %v737, %v773
          %v783 = vadd.f32 %v738, %v776
          %v784 = vadd.f32 %v739, %v779
          %785 = vst.msk [vmem:[#allocation5] sm:$0xff] %vm499, %v781
          %786 = vst.msk [vmem:[#allocation5 + $0x8] sm:$0xff] %vm499, %v782
          %787 = vst.msk [vmem:[#allocation5 + $0x10] sm:$0xff] %vm499, %v783
          %788 = vst.msk [vmem:[#allocation5 + $0x18] sm:$0xff] %vm499, %v784
          %789 = vst.msk [vmem:[#allocation3] sm:$0xff] %vm707, %v631
          %790 = vst.msk [vmem:[#allocation3 + $0x8] sm:$0xff] %vm707, %v632
          %791 = vst.msk [vmem:[#allocation3 + $0x10] sm:$0xff] %vm707, %v633
          %792 = vst.msk [vmem:[#allocation3 + $0x18] sm:$0xff] %vm707, %v634
        $region52: #{tpu_custom_call.1} parent=43 // pred_fallthru
          _
        // Predicated region
        $region53: #{tpu_custom_call.1} parent=43 // pred_check
          %p793 = pneg %p309
        $region54: #{tpu_custom_call.1} parent=43 // pred_check_branch
          %795 = sbr.rel (%p793) target = $region56
        $region55: #{tpu_custom_call.1} parent=43 // pred_region
          %v796 = vld [vmem:[#allocation5] sm:$0xff]
          %v797 = vld [vmem:[#allocation5 + $0x8] sm:$0xff]
          %v798 = vld [vmem:[#allocation5 + $0x10] sm:$0xff]
          %v799 = vld [vmem:[#allocation5 + $0x18] sm:$0xff]
          %v800 = vld [vmem:[#allocation4] sm:$0xff]
          %v801 = vld [vmem:[#allocation4 + $0x8] sm:$0xff]
          %v802 = vld [vmem:[#allocation4 + $0x10] sm:$0xff]
          %v803 = vld [vmem:[#allocation4 + $0x18] sm:$0xff]
          %v804 = vrcp.pop %v800
          %v805 = vrcp.pop %v801
          %v806 = vrcp.pop %v802
          %v807 = vrcp.pop %v803
          %809 = vset.pattern.permute.xlu0 0
          %810 = vperm.xlu0 %809, %v804
          %v811 = vpop.permute.xlu0 %810
          %814 = vset.pattern.permute.xlu0 0
          %815 = vperm.xlu0 %814, %v805
          %v816 = vpop.permute.xlu0 %815
          %819 = vset.pattern.permute.xlu0 0
          %820 = vperm.xlu0 %819, %v806
          %v821 = vpop.permute.xlu0 %820
          %824 = vset.pattern.permute.xlu0 0
          %825 = vperm.xlu0 %824, %v807
          %v826 = vpop.permute.xlu0 %825
          %v828 = vmul.f32 %v796, %v811
          %v829 = vmul.f32 %v797, %v816
          %v830 = vmul.f32 %v798, %v821
          %v831 = vmul.f32 %v799, %v826
          %833 = vrot.lane.b32.xlu0 %v829, 16
          %v834 = vpop.permute.xlu0 %833
          %837 = vrot.lane.b32.xlu0 %v830, 32
          %v838 = vpop.permute.xlu0 %837
          %841 = vrot.lane.b32.xlu0 %v831, 48
          %v842 = vpop.permute.xlu0 %841
          %vm844 = vcmask 130048
          %v845 = vsel %vm844, %v828, %v834
          %vm846 = vcmask 261120
          %v847 = vsel %vm846, %v845, %v838
          %vm848 = vcmask 392192
          %v849 = vsel %vm848, %v847, %v842
          %v850 = vld [vmem:[%s5] sm:$0xff]
          %v851 = vld [vmem:[%s5 + $0x8] sm:$0xff]
          %v852 = vld [vmem:[%s5 + $0x10] sm:$0xff]
          %v853 = vld [vmem:[%s5 + $0x18] sm:$0xff]
          %v854 = vld [vmem:[%s5 + $0x20] sm:$0xff]
          %v855 = vld [vmem:[%s5 + $0x28] sm:$0xff]
          %v856 = vld [vmem:[%s5 + $0x30] sm:$0xff]
          %v857 = vld [vmem:[%s5 + $0x38] sm:$0xff]
          %vm858 = vcmask 523264
          %v860 = vsel %vm858, %v849, 0
          %862 = vmatpush.msra.mxu0 0.0
          %863 = vmatpush.msra.mxu0 0.0
          %864 = vmatpush.msra.mxu0 0.0
          %865 = vmatpush.msra.mxu0 0.0
          %866 = vmatpush.msra.mxu0 0.0
          %867 = vmatpush.msra.mxu0 0.0
          %868 = vmatpush.msra.mxu0 0.0
          %869 = vmatpush.msra.mxu0 0.0
          %870 = vmatpush.msra.mxu0 %v857
          %871 = vmatpush.msra.mxu0 %v856
          %872 = vmatpush.msra.mxu0 %v855
          %873 = vmatpush.msra.mxu0 %v854
          %874 = vmatpush.msra.mxu0 %v853
          %875 = vmatpush.msra.mxu0 %v852
          %876 = vmatpush.msra.mxu0 %v851
          %877 = vmatpush.msra.mxu0 %v850
          %878 = vmatmul.f32.gmra.mxu0 %v860
          %v879 = vpop.f32.mrf.mxu0
          %v880 = vadd.f32 0.0, %v879
          %881 = vdwg.mxu0
          %882 = vst.msk [vmem:[%s292] sm:$0xff] %vm846, %v880
        $region56: #{tpu_custom_call.1} parent=43 // pred_fallthru
          _
        %s883 = sand.u32 %s189, 1
        %s884 = scalar_lea.sflag [#allocation7], %s883
        %s885 = sand.u32 %s189, 1
        %s886 = smul.addr %s885, 8
        %s887 = scalar_lea.vmem [#allocation6], %s886
        // Predicated region
        $region57: #{tpu_custom_call.1} parent=43 // pred_check
          %p888 = pneg %p199
        $region58: #{tpu_custom_call.1} parent=43 // pred_check_branch
          %890 = sbr.rel (%p888) target = $region60
        $region59: #{tpu_custom_call.1} parent=43 // pred_region
          %892 = vsyncadd %s884, 0
          %s893 = sadd.s32 %s26, %s25
          %s894 = smul.addr %s893, 8
          %s895 = scalar_lea.hbm %s6, %s894
          %s897 = sshll.u32 %s887, 4
          %s898 = int_to_ptr.vmem [resolvable:$true] %s897
          %s899 = sshll.u32 %s895, 4
          %s900 = int_to_ptr.hbm [resolvable:$true] %s899
          %902 = dma.vmem_to_hbm [thread:$0]  %s898, 128, %s900, %s884
        $region60: #{tpu_custom_call.1} parent=43 // pred_fallthru
          _
      $region44: #{tpu_custom_call.1} parent=5 // pred_fallthru
        _
      %p903 = scmp.le.s32.totalorder 2, %s15
      // Predicated region
      $region61: #{tpu_custom_call.1} parent=5 // pred_check
        %p904 = pneg %p903
      $region62: #{tpu_custom_call.1} parent=5 // pred_check_branch
        %906 = sbr.rel (%p904) target = $region64
      $region63: #{tpu_custom_call.1} parent=5 // pred_region
        %s907 = ssub.s32 %s15, 2
        // Predicated region
        $region65: #{tpu_custom_call.1} parent=63 // pred_check
          %p908 = pneg %p205
        $region66: #{tpu_custom_call.1} parent=63 // pred_check_branch
          %910 = sbr.rel (%p908) target = $region68
        $region67: #{tpu_custom_call.1} parent=63 // pred_region
          %s911 = sand.u32 %s190, 1
          %s912 = scalar_lea.sflag [#allocation7], %s911
          %s913 = sand.u32 %s190, 1
          %s914 = smul.addr %s913, 8
          %s915 = scalar_lea.vmem [#allocation6], %s914
          %917 = dma.done %s912, 128
        $region68: #{tpu_custom_call.1} parent=63 // pred_fallthru
          _
      $region64: #{tpu_custom_call.1} parent=5 // pred_fallthru
        _
    $region6: #{tpu_custom_call.1} parent=1 // loop_footer
      %s19 = sadd.s32 1, %s15
    $region7: #{tpu_custom_call.1} parent=1 // loop_footer_branch
      %14 = sbr.rel target = $region3
    $region8: #{tpu_custom_call.1} parent=1 // loop_exit
      _
    %918 = vsyncpa [#allocation7], 1
    %s919 = scalar_lea.sflag [#allocation7], 1
    %920 = vsyncpa %s919, 1

</llo_original>
